<compile_context>
chip_gen: v7x
topology: tpu7x:2x2x1
jax: 0.10.0
libtpu: 0.0.40
codegen_flags: <defaults>
</compile_context>

<pallas_src>
import jax
import jax.numpy as jnp
from jax.experimental import pallas as pl
from jax.experimental.pallas import tpu as pltpu


def weighted_layer_pooling_kernel(w_ref, x_ref, o_ref):
    """w_ref: SMEM (L,) f32 layer weights (layers >= layer_start).
    x_ref: VMEM (TM, H) row-tile of layer `layer_start + l` (squeezed layer dim).
    o_ref: VMEM (TM, H) f32 output tile, resident across the layer grid axis."""
    l = pl.program_id(1)
    n_layers = pl.num_programs(1)

    wl = w_ref[l]
    contrib = wl * x_ref[...].astype(jnp.float32)

    @pl.when(l == 0)
    def _():
        o_ref[...] = contrib

    @pl.when(l != 0)
    def _():
        o_ref[...] += contrib

    @pl.when(l == n_layers - 1)
    def _():
        # sum(w) from SMEM scalars (L is small and static).
        w_sum = w_ref[0]
        for i in range(1, w_ref.shape[0]):
            w_sum = w_sum + w_ref[i]
        o_ref[...] = o_ref[...] / w_sum


def _pick_row_tile(M, H, vmem_budget_bytes=16 * 1024 * 1024):
    """Row tile TM: per grid step we hold ~4 x (TM, H) f32 buffers (input + output,
    each double-buffered).  Keep that within a budget safe even on v7x's 32 MiB
    default scoped VMEM, prefer divisors of M, else fall back to a multiple of 8
    (Pallas masks the partial last tile)."""
    max_tm = max(8, vmem_budget_bytes // (4 * H * 4))
    if M <= max_tm:
        return M  # full-extent block is always legal
    for t in (2048, 1024, 512, 256, 128, 64, 32, 16, 8):
        if t <= max_tm and M % t == 0:
            return t
    return (max_tm // 8) * 8


def weighted_layer_pooling(all_hidden_states, layer_weights, layer_start=4):
    """all_hidden_states: (num_hidden_layers + 1, B, S, H) stacked hidden states.
    layer_weights: (num_hidden_layers + 1 - layer_start,) learned weights.
    Returns (B, S, H) f32 weighted average, matching the PyTorch forward."""
    L_total, B, S, H = all_hidden_states.shape
    L = L_total - layer_start
    assert layer_weights.shape == (L,), (layer_weights.shape, L)

    M = B * S
    # Free reshape of a contiguous stack; the layer slice happens in the index_map,
    # so no HBM copy of the hidden-state stack is made in the wrapper.
    x = all_hidden_states.reshape(L_total, M, H)
    w = layer_weights.astype(jnp.float32)

    TM = _pick_row_tile(M, H)
    grid = (pl.cdiv(M, TM), L)

    out = pl.pallas_call(
        weighted_layer_pooling_kernel,
        out_shape=jax.ShapeDtypeStruct((M, H), jnp.float32),
        grid_spec=pltpu.PrefetchScalarGridSpec(
            num_scalar_prefetch=0,
            grid=grid,
            in_specs=[
                # L layer weights live whole in SMEM for the entire kernel.
                pl.BlockSpec(memory_space=pltpu.MemorySpace.SMEM),
                # One layer's row tile per step; layer_start folded into the index_map
                # (block size 1 on the layer dim -> block index == layer index).
                pl.BlockSpec((None, TM, H), lambda i, l: (layer_start + l, i, 0)),
            ],
            out_specs=pl.BlockSpec((TM, H), lambda i, l: (i, 0)),
        ),
        compiler_params=pltpu.CompilerParams(
            dimension_semantics=("parallel", "arbitrary")),
    )(w, x)

    return out.reshape(B, S, H)


if __name__ == "__main__":
    # Small config consistent with the module's forward.
    num_hidden_layers = 8
    layer_start = 4
    batch, seq_len, hidden = 2, 8, 128
    L = num_hidden_layers + 1 - layer_start

    key = jax.random.PRNGKey(0)
    k_h, k_w = jax.random.split(key)

    # Stacked hidden states: (num_hidden_layers + 1, B, S, H).
    all_hidden_states = jax.random.normal(
        k_h, (num_hidden_layers + 1, batch, seq_len, hidden), jnp.float32)
    # Learned layer weights (module default is ones; use non-trivial values here).
    layer_weights = jax.random.uniform(k_w, (L,), jnp.float32, 0.5, 1.5)

    out = weighted_layer_pooling(all_hidden_states, layer_weights, layer_start)
    out = jax.block_until_ready(out)

    # Pure-JAX reference of the PyTorch forward.
    w4 = layer_weights.reshape(L, 1, 1, 1)
    ref = (w4 * all_hidden_states[layer_start:]).sum(axis=0) / layer_weights.sum()

    assert out.shape == (batch, seq_len, hidden), out.shape
    assert jnp.allclose(out, ref, rtol=1e-5, atol=1e-5), float(
        jnp.max(jnp.abs(out - ref)))
    print("KERNEL_OK")
</pallas_src>

<mosaic_0001>
module attributes {stable_mosaic.version = 11 : i64} {
  func.func @weighted_layer_pooling_kernel(%arg0: i32, %arg1: i32, %arg2: memref<5xf32, #tpu.memory_space<smem>>, %arg3: memref<1x16x128xf32, #tpu.memory_space<vmem>>, %arg4: memref<16x128xf32, #tpu.memory_space<vmem>>) attributes {dimension_semantics = [#tpu.dimension_semantics<parallel>, #tpu.dimension_semantics<arbitrary>], iteration_bounds = array<i64: 1, 5>, scalar_prefetch = 0 : i64, scratch_operands = 0 : i64, tpu.core_type = #tpu.core_type<tc>, window_params = [{transform_indices = @transform_0, window_bounds = array<i64: 5>}, {transform_indices = @transform_1, window_bounds = array<i64: 1, 16, 128>}, {transform_indices = @transform_2, window_bounds = array<i64: 16, 128>}]} {
    %0 = arith.index_cast %arg1 : i32 to index
    %1 = memref.load %arg2[%0] : memref<5xf32, #tpu.memory_space<smem>>
    %c0 = arith.constant 0 : index
    %c0_0 = arith.constant 0 : index
    %c0_1 = arith.constant 0 : index
    %2 = vector.load %arg3[%c0, %c0_0, %c0_1] : memref<1x16x128xf32, #tpu.memory_space<vmem>>, vector<1x16x128xf32>
    %3 = vector.shape_cast %2 : vector<1x16x128xf32> to vector<16x128xf32>
    %4 = vector.broadcast %1 : f32 to vector<16x128xf32>
    %5 = arith.mulf %4, %3 : vector<16x128xf32>
    %c0_i32 = arith.constant 0 : i32
    %6 = arith.cmpi eq, %arg1, %c0_i32 : i32
    %7 = arith.extui %6 : i1 to i32
    %c0_i32_2 = arith.constant 0 : i32
    %8 = arith.cmpi ne, %7, %c0_i32_2 : i32
    scf.if %8 {
      %c0_6 = arith.constant 0 : index
      %c0_7 = arith.constant 0 : index
      %15 = vector.load %arg4[%c0_6, %c0_7] : memref<16x128xf32, #tpu.memory_space<vmem>>, vector<16x128xf32>
      tpu.vector_store %arg4[%c0_6, %c0_7], %5 {strides = array<i32>} : memref<16x128xf32, #tpu.memory_space<vmem>>, vector<16x128xf32>,
    } else {
    }
    %c0_i32_3 = arith.constant 0 : i32
    %9 = arith.cmpi ne, %arg1, %c0_i32_3 : i32
    %10 = arith.extui %9 : i1 to i32
    %c0_i32_4 = arith.constant 0 : i32
    %11 = arith.cmpi ne, %10, %c0_i32_4 : i32
    scf.if %11 {
      %c0_6 = arith.constant 0 : index
      %c0_7 = arith.constant 0 : index
      %15 = vector.load %arg4[%c0_6, %c0_7] : memref<16x128xf32, #tpu.memory_space<vmem>>, vector<16x128xf32>
      %16 = arith.addf %15, %5 : vector<16x128xf32>
      %c0_8 = arith.constant 0 : index
      %c0_9 = arith.constant 0 : index
      %17 = vector.load %arg4[%c0_8, %c0_9] : memref<16x128xf32, #tpu.memory_space<vmem>>, vector<16x128xf32>
      tpu.vector_store %arg4[%c0_8, %c0_9], %16 {strides = array<i32>} : memref<16x128xf32, #tpu.memory_space<vmem>>, vector<16x128xf32>,
    } else {
    }
    %c4_i32 = arith.constant 4 : i32
    %12 = arith.cmpi eq, %arg1, %c4_i32 : i32
    %13 = arith.extui %12 : i1 to i32
    %c0_i32_5 = arith.constant 0 : i32
    %14 = arith.cmpi ne, %13, %c0_i32_5 : i32
    scf.if %14 {
      %c0_6 = arith.constant 0 : index
      %15 = memref.load %arg2[%c0_6] : memref<5xf32, #tpu.memory_space<smem>>
      %c1 = arith.constant 1 : index
      %16 = memref.load %arg2[%c1] : memref<5xf32, #tpu.memory_space<smem>>
      %17 = arith.addf %15, %16 : f32
      %c2 = arith.constant 2 : index
      %18 = memref.load %arg2[%c2] : memref<5xf32, #tpu.memory_space<smem>>
      %19 = arith.addf %17, %18 : f32
      %c3 = arith.constant 3 : index
      %20 = memref.load %arg2[%c3] : memref<5xf32, #tpu.memory_space<smem>>
      %21 = arith.addf %19, %20 : f32
      %c4 = arith.constant 4 : index
      %22 = memref.load %arg2[%c4] : memref<5xf32, #tpu.memory_space<smem>>
      %23 = arith.addf %21, %22 : f32
      %c0_7 = arith.constant 0 : index
      %c0_8 = arith.constant 0 : index
      %24 = vector.load %arg4[%c0_7, %c0_8] : memref<16x128xf32, #tpu.memory_space<vmem>>, vector<16x128xf32>
      %25 = vector.broadcast %23 : f32 to vector<16x128xf32>
      %26 = arith.divf %24, %25 : vector<16x128xf32>
      %c0_9 = arith.constant 0 : index
      %c0_10 = arith.constant 0 : index
      %27 = vector.load %arg4[%c0_9, %c0_10] : memref<16x128xf32, #tpu.memory_space<vmem>>, vector<16x128xf32>
      tpu.vector_store %arg4[%c0_9, %c0_10], %26 {strides = array<i32>} : memref<16x128xf32, #tpu.memory_space<vmem>>, vector<16x128xf32>,
    } else {
    }
    return
  }
  func.func @transform_0(%arg0: i32, %arg1: i32) -> i32 {
    %c0_i32 = arith.constant 0 : i32
    %c0_i32_0 = arith.constant 0 : i32
    return %c0_i32 : i32
  }
  func.func @transform_1(%arg0: i32, %arg1: i32) -> (i32, i32, i32) {
    %c4_i32 = arith.constant 4 : i32
    %0 = arith.addi %c4_i32, %arg1 : i32
    %c0_i32 = arith.constant 0 : i32
    %c0_i32_0 = arith.constant 0 : i32
    return %0, %arg0, %c0_i32 : i32, i32, i32
  }
  func.func @transform_2(%arg0: i32, %arg1: i32) -> (i32, i32) {
    %c0_i32 = arith.constant 0 : i32
    %c0_i32_0 = arith.constant 0 : i32
    return %arg0, %c0_i32 : i32, i32
  }
}

</mosaic_0001>

<llo_original>
// kernel: tpu_custom_call.1
$region0: #{tpu_custom_call.1}
  #allocation0 [shape = 'u32[]', space=smem, size = 0x4, offset = 0x4, fixed_abs, tag = 'smem constant byte address 0x4 - core index']
  #allocation1 [shape = 'u32[144,128]{1,0:T(1,128)}', space=vmem, size = 0x12000, scoped, tag = 'internal scratch']
  %s0 = inlined_call_operand.hbm [shape: f32[5], index: 0, kind: input, shape index: {}]
  %s1 = inlined_call_operand.hbm [shape: f32[9,16,128], index: 1, kind: input, shape index: {}]
  %s2 = inlined_call_operand.hbm [shape: f32[16,128], index: 2, kind: output, shape index: {}]
  %s3 = sld [smem:[#allocation0]]
  $region61: #{tpu_custom_call.1} parent=0
    _
  %s5 = ssub.s32 1, %s3
  %s6 = scalar_select 0, %s5, %s3
  $region1: #{tpu_custom_call.1} parent=0
    #allocation2 [shape = 'u8[512]{0}', space=smem, size = 0x200, scoped, tag = 'input window, operand 0, single buffered']
    #allocation3 [shape = 's32[2]{0}', space=sflag, size = 0x8, scoped, tag = 'scoped memory for tpu_custom_call.1']
    #allocation4 [shape = 's32[2]{0}', space=sflag, size = 0x8, scoped, tag = 'scoped memory for tpu_custom_call.1']
    #allocation5 [shape = 's32[2]{0}', space=sflag, size = 0x8, scoped, tag = 'scoped memory for tpu_custom_call.1']
    #allocation6 [shape = 'u8[16384]{0}', space=vmem, size = 0x4000, scoped, tag = 'input window, operand 1']
    #allocation7 [shape = 'u8[8192]{0}', space=vmem, size = 0x2000, scoped, tag = 'output window, operand 0, single buffered']
    %7 = vsyncpa [#allocation5], 0
    %8 = vsyncpa [#allocation3], 0
    %s9 = scalar_lea.sflag [#allocation3], 1
    %10 = vsyncpa %s9, 0
    %11 = vsyncpa [#allocation4], 0
    loop: start=0, step=1, limit=7
    $region2: #{tpu_custom_call.1} parent=1 // loop_pre_header
      _
    $region3: #{tpu_custom_call.1} parent=1 // loop_header
      %s13 = sphi 0, %s17
      %p14 = scmp.ge.s32.totalorder %s13, 7
      %s20 = sphi 0, %s32
      %s21 = sphi 0, %s28
      %s22 = sphi 0, %s20
      %s23 = sphi 0, %s21
      %s24 = sphi 0, %s22
      %s25 = sphi 0, %s23
      %s33 = sphi 0, %s33
      %s35 = sphi 0, %s33
      %s36 = sphi 0, %s35
      %s50 = sphi 0, %s36
      %s60 = sphi 0, %s62
      %s63 = sphi 0, %s60
      %s64 = sphi 0, %s63
      %s80 = sphi 0, %s64
      %s86 = sphi 0, %s88
      %s89 = sphi 0, %s86
      %s90 = sphi 0, %s89
      %s106 = sphi 0, %s90
    $region4: #{tpu_custom_call.1} parent=1 // loop_header_branch
      %16 = sbr.rel (%p14) target = $region8
    $region5: #{tpu_custom_call.1} parent=1 // loop_body
      %s18 = ssub.s32 %s13, 1
      %s19 = ssub.s32 %s13, 2
      %s26 = sadd.s32 1, %s21
      %p27 = scmp.ge.s32.totalorder %s26, 5
      %s28 = scalar_select %p27, 0, %s26
      %s29 = sadd.s32 1, %s20
      %s30 = scalar_select %p27, %s29, %s20
      %p31 = scmp.ge.s32.totalorder %s30, 1
      %s32 = scalar_select %p31, 0, %s30
      %s34 = sadd.s32 %s33, 1
      %p37 = scmp.eq.s32.totalorder %s13, 4
      %p38 = scmp.ne.s32.totalorder %s33, %s35
      %p39 = scmp.eq.s32.totalorder %s13, 0
      %p40 = por %p38, %p39
      %p41 = scmp.ne.s32.totalorder %s33, %s35
      %p42 = scmp.eq.s32.totalorder %s18, 4
      %p43 = por %p41, %p42
      %p44 = scmp.ne.s32.totalorder %s35, %s36
      %p45 = scmp.eq.s32.totalorder %s18, 0
      %p46 = por %p44, %p45
      %p47 = scmp.ne.s32.totalorder %s35, %s36
      %p48 = scmp.eq.s32.totalorder %s19, 4
      %p49 = por %p47, %p48
      %p51 = scmp.ne.s32.totalorder %s36, %s50
      %p52 = scmp.eq.s32.totalorder %s19, 0
      %p53 = por %p51, %p52
      %s54 = sadd.s32 %s21, 4
      %s55 = sadd.s32 %s28, 4
      %s56 = ssub.s32 %s54, %s55
      %s57 = ssub.s32 %s20, %s32
      %s58 = sor.u32 %s56, %s57
      %p59 = scmp.eq.s32.totalorder %s58, 0
      %s61 = sadd.s32 %s60, 1
      %s62 = scalar_select %p59, %s60, %s61
      %p65 = pneg %p59
      %p66 = scmp.eq.s32.totalorder %s13, 4
      %p67 = por %p65, %p66
      %p68 = scmp.ne.s32.totalorder %s60, %s63
      %p69 = scmp.eq.s32.totalorder %s13, 0
      %p70 = por %p68, %p69
      %p71 = scmp.ne.s32.totalorder %s60, %s63
      %p72 = scmp.eq.s32.totalorder %s18, 4
      %p73 = por %p71, %p72
      %p74 = scmp.ne.s32.totalorder %s63, %s64
      %p75 = scmp.eq.s32.totalorder %s18, 0
      %p76 = por %p74, %p75
      %p77 = scmp.ne.s32.totalorder %s63, %s64
      %p78 = scmp.eq.s32.totalorder %s19, 4
      %p79 = por %p77, %p78
      %p81 = scmp.ne.s32.totalorder %s64, %s80
      %p82 = scmp.eq.s32.totalorder %s19, 0
      %p83 = por %p81, %p82
      %s84 = ssub.s32 %s20, %s32
      %p85 = scmp.eq.s32.totalorder %s84, 0
      %s87 = sadd.s32 %s86, 1
      %s88 = scalar_select %p85, %s86, %s87
      %p91 = pneg %p85
      %p92 = scmp.eq.s32.totalorder %s13, 4
      %p93 = por %p91, %p92
      %p94 = scmp.ne.s32.totalorder %s86, %s89
      %p95 = scmp.eq.s32.totalorder %s13, 0
      %p96 = por %p94, %p95
      %p97 = scmp.ne.s32.totalorder %s86, %s89
      %p98 = scmp.eq.s32.totalorder %s18, 4
      %p99 = por %p97, %p98
      %p100 = scmp.ne.s32.totalorder %s89, %s90
      %p101 = scmp.eq.s32.totalorder %s18, 0
      %p102 = por %p100, %p101
      %p103 = scmp.ne.s32.totalorder %s89, %s90
      %p104 = scmp.eq.s32.totalorder %s19, 4
      %p105 = por %p103, %p104
      %p107 = scmp.ne.s32.totalorder %s90, %s106
      %p108 = scmp.eq.s32.totalorder %s19, 0
      %p109 = por %p107, %p108
      %p110 = scmp.le.s32.totalorder 1, %s13
      %p111 = scmp.lt.s32.totalorder %s13, 6
      %p112 = pnand %p110, %p111
      %p113 = pneg %p112
      // Predicated region
      $region9: #{tpu_custom_call.1} parent=5 // pred_check
        _
      $region10: #{tpu_custom_call.1} parent=5 // pred_check_branch
        %115 = sbr.rel (%p112) target = $region12
      $region11: #{tpu_custom_call.1} parent=5 // pred_region
        %s116 = ssub.s32 %s13, 1
        // Predicated region
        $region13: #{tpu_custom_call.1} parent=11 // pred_check
          %p117 = pneg %p46
        $region14: #{tpu_custom_call.1} parent=11 // pred_check_branch
          %119 = sbr.rel (%p117) target = $region16
        $region15: #{tpu_custom_call.1} parent=11 // pred_region
          %s121 = ssub.s32 16, 16
          %122 = vsyncadd [#allocation5], %s121
          %125 = dma.hbm_to_smem %s0, 16, [#allocation2], [#allocation5]
        $region16: #{tpu_custom_call.1} parent=11 // pred_fallthru
          _
      $region12: #{tpu_custom_call.1} parent=5 // pred_fallthru
        _
      %p126 = scmp.lt.s32.totalorder %s13, 5
      // Predicated region
      $region17: #{tpu_custom_call.1} parent=5 // pred_check
        %p127 = pneg %p126
      $region18: #{tpu_custom_call.1} parent=5 // pred_check_branch
        %129 = sbr.rel (%p127) target = $region20
      $region19: #{tpu_custom_call.1} parent=5 // pred_region
        // Predicated region
        $region21: #{tpu_custom_call.1} parent=19 // pred_check
          %p130 = pneg %p70
        $region22: #{tpu_custom_call.1} parent=19 // pred_check_branch
          %132 = sbr.rel (%p130) target = $region24
        $region23: #{tpu_custom_call.1} parent=19 // pred_region
          %s133 = sand.u32 %s60, 1
          %s134 = scalar_lea.sflag [#allocation3], %s133
          %s135 = sand.u32 %s60, 1
          %s136 = smul.addr %s135, 16
          %s137 = scalar_lea.vmem [#allocation6], %s136
          %s138 = sadd.s32 %s21, 4
          %s139 = smul.u32 2, %s20
          %s141 = ssub.s32 256, 256
          %142 = vsyncadd %s134, %s141
          %s143 = smul.addr %s138, 2
          %s144 = sadd.s32 %s139, %s143
          %s145 = smul.addr %s144, 128
          %s146 = scalar_lea.hbm %s1, %s145
          %s147 = sshll.u32 %s137, 4
          %s148 = int_to_ptr.vmem [resolvable:$true] %s147
          %153 = dma.hbm_to_vmem [thread:$0]  %s146, 256, %s148, %s134, 128, 128, 8
        $region24: #{tpu_custom_call.1} parent=19 // pred_fallthru
          _
      $region20: #{tpu_custom_call.1} parent=5 // pred_fallthru
        _
      %p154 = scmp.le.s32.totalorder 1, %s13
      %p155 = scmp.lt.s32.totalorder %s13, 6
      %p156 = pnand %p154, %p155
      %p157 = pneg %p156
      // Predicated region
      $region25: #{tpu_custom_call.1} parent=5 // pred_check
        _
      $region26: #{tpu_custom_call.1} parent=5 // pred_check_branch
        %159 = sbr.rel (%p156) target = $region28
      $region27: #{tpu_custom_call.1} parent=5 // pred_region
        %s160 = ssub.s32 %s13, 1
        // Predicated region
        $region29: #{tpu_custom_call.1} parent=27 // pred_check
          %p161 = pneg %p46
        $region30: #{tpu_custom_call.1} parent=27 // pred_check_branch
          %163 = sbr.rel (%p161) target = $region32
        $region31: #{tpu_custom_call.1} parent=27 // pred_region
          %164 = dma.done [#allocation5], 16
        $region32: #{tpu_custom_call.1} parent=27 // pred_fallthru
          _
        %s165 = sand.u32 %s63, 1
        %s166 = scalar_lea.sflag [#allocation3], %s165
        %s167 = sand.u32 %s63, 1
        %s168 = smul.addr %s167, 16
        %s169 = scalar_lea.vmem [#allocation6], %s168
        // Predicated region
        $region33: #{tpu_custom_call.1} parent=27 // pred_check
          %p170 = pneg %p76
        $region34: #{tpu_custom_call.1} parent=27 // pred_check_branch
          %172 = sbr.rel (%p170) target = $region36
        $region35: #{tpu_custom_call.1} parent=27 // pred_region
          %173 = dma.done %s166, 256
        $region36: #{tpu_custom_call.1} parent=27 // pred_fallthru
          _
        %174 = sfence
        %p175 = pneg %p46
        %p176 = pneg %p43
        %s177 = sand.u32 %s63, 1
        %s178 = scalar_lea.sflag [#allocation3], %s177
        %s179 = sand.u32 %s63, 1
        %s180 = smul.addr %s179, 16
        %s181 = scalar_lea.vmem [#allocation6], %s180
        %p182 = pneg %p76
        %p183 = pneg %p73
        %p184 = pneg %p102
        %p185 = pneg %p99
        %s186 = sadd.s32 %s23, 4
        %s187 = smul.u32 2, %s22
        %s188 = smul.u32 2, %s22
        %s189 = sld [smem:[#allocation2 + %s23]]
        %v190 = vld [vmem:[%s169] sm:$0xff]
        %v191 = vld [vmem:[%s169 + $0x8] sm:$0xff]
        %v192 = vstv %s189
        %v193 = vmul.f32 %v192, %v190
        %v194 = vmul.f32 %v192, %v191
        %p195 = scmp.eq.s32.totalorder %s23, 0
        // Predicated region
        $region37: #{tpu_custom_call.1} parent=27 // pred_check
          %p196 = pneg %p195
        $region38: #{tpu_custom_call.1} parent=27 // pred_check_branch
          %198 = sbr.rel (%p196) target = $region40
        $region39: #{tpu_custom_call.1} parent=27 // pred_region
          %199 = vst [vmem:[#allocation7] sm:$0xff] %v193
          %200 = vst [vmem:[#allocation7 + $0x8] sm:$0xff] %v194
        $region40: #{tpu_custom_call.1} parent=27 // pred_fallthru
          _
        %p201 = scmp.ne.s32.totalorder %s23, 0
        // Predicated region
        $region41: #{tpu_custom_call.1} parent=27 // pred_check
          %p202 = pneg %p201
        $region42: #{tpu_custom_call.1} parent=27 // pred_check_branch
          %204 = sbr.rel (%p202) target = $region44
        $region43: #{tpu_custom_call.1} parent=27 // pred_region
          %v205 = vld [vmem:[#allocation7] sm:$0xff]
          %v206 = vld [vmem:[#allocation7 + $0x8] sm:$0xff]
          %v207 = vadd.f32 %v205, %v193
          %v208 = vadd.f32 %v206, %v194
          %209 = vst [vmem:[#allocation7] sm:$0xff] %v207
          %210 = vst [vmem:[#allocation7 + $0x8] sm:$0xff] %v208
        $region44: #{tpu_custom_call.1} parent=27 // pred_fallthru
          _
        %p211 = scmp.eq.s32.totalorder %s23, 4
        // Predicated region
        $region45: #{tpu_custom_call.1} parent=27 // pred_check
          %p212 = pneg %p211
        $region46: #{tpu_custom_call.1} parent=27 // pred_check_branch
          %214 = sbr.rel (%p212) target = $region48
        $region47: #{tpu_custom_call.1} parent=27 // pred_region
          %s215 = sld [smem:[#allocation2]]
          %s216 = sld [smem:[#allocation2 + $0x1]]
          %s217 = sadd.f32 %s215, %s216
          %s218 = sld [smem:[#allocation2 + $0x2]]
          %s219 = sadd.f32 %s217, %s218
          %s220 = sld [smem:[#allocation2 + $0x3]]
          %s221 = sadd.f32 %s219, %s220
          %s222 = sld [smem:[#allocation2 + $0x4]]
          %s223 = sadd.f32 %s221, %s222
          %v224 = vld [vmem:[#allocation7] sm:$0xff]
          %v225 = vld [vmem:[#allocation7 + $0x8] sm:$0xff]
          %v226 = vstv %s223
          %v227 = vrcp.pop %v226
          %v228 = vmul.f32 %v224, %v227
          %v229 = vmul.f32 %v225, %v227
          %230 = vst [vmem:[#allocation7] sm:$0xff] %v228
          %231 = vst [vmem:[#allocation7 + $0x8] sm:$0xff] %v229
        $region48: #{tpu_custom_call.1} parent=27 // pred_fallthru
          _
        // Predicated region
        $region49: #{tpu_custom_call.1} parent=27 // pred_check
          %p232 = pneg %p99
        $region50: #{tpu_custom_call.1} parent=27 // pred_check_branch
          %234 = sbr.rel (%p232) target = $region52
        $region51: #{tpu_custom_call.1} parent=27 // pred_region
          %s235 = smul.u32 2, %s22
          %s237 = ssub.s32 256, 256
          %238 = vsyncadd [#allocation4], %s237
          %s239 = smul.addr %s235, 128
          %s240 = scalar_lea.hbm %s2, %s239
          %s241 = sshll.u32 [#allocation7], 4
          %s242 = int_to_ptr.vmem [resolvable:$true] %s241
          %247 = dma.vmem_to_hbm [thread:$0]  %s242, 256, %s240, [#allocation4], 128, 128, 8
        $region52: #{tpu_custom_call.1} parent=27 // pred_fallthru
          _
        // Predicated region
        $region53: #{tpu_custom_call.1} parent=27 // pred_check
          %p248 = pneg %p99
        $region54: #{tpu_custom_call.1} parent=27 // pred_check_branch
          %250 = sbr.rel (%p248) target = $region56
        $region55: #{tpu_custom_call.1} parent=27 // pred_region
          %251 = dma.done [#allocation4], 256
        $region56: #{tpu_custom_call.1} parent=27 // pred_fallthru
          _
      $region28: #{tpu_custom_call.1} parent=5 // pred_fallthru
        _
      %p252 = scmp.le.s32.totalorder 2, %s13
      // Predicated region
      $region57: #{tpu_custom_call.1} parent=5 // pred_check
        %p253 = pneg %p252
      $region58: #{tpu_custom_call.1} parent=5 // pred_check_branch
        %255 = sbr.rel (%p253) target = $region60
      $region59: #{tpu_custom_call.1} parent=5 // pred_region
        %s256 = ssub.s32 %s13, 2
      $region60: #{tpu_custom_call.1} parent=5 // pred_fallthru
        _
    $region6: #{tpu_custom_call.1} parent=1 // loop_footer
      %s17 = sadd.s32 1, %s13
    $region7: #{tpu_custom_call.1} parent=1 // loop_footer_branch
      %12 = sbr.rel target = $region3
    $region8: #{tpu_custom_call.1} parent=1 // loop_exit
      _
    %257 = vsyncpa [#allocation3], 1
    %s258 = scalar_lea.sflag [#allocation3], 1
    %259 = vsyncpa %s258, 1
    %260 = vsyncpa [#allocation4], 1
    %s261 = scalar_lea.sflag [#allocation4], 1
    %262 = vsyncpa %s261, 1
    %263 = vsyncpa [#allocation5], 1
    %s264 = scalar_lea.sflag [#allocation5], 1
    %265 = vsyncpa %s264, 1

</llo_original>
